<compile_context>
chip_gen: v5e
topology: v5e:2x2
jax: 0.10.0
libtpu: 0.0.40
codegen_flags: <defaults>
</compile_context>

<pallas_src>
import functools

import jax
import jax.numpy as jnp
from jax import lax
from jax.experimental import pallas as pl
from jax.experimental.pallas import tpu as pltpu

_LANES = 128


def _embbag_linear_kernel(text_ref, bag_ref, offext_ref,          # scalar prefetch (SMEM)
                          inv_cnt_ref, wt_ref, bias_ref, emb_ref,  # inputs (VMEM)
                          out_ref,                                  # output (VMEM)
                          acc_ref):                                 # scratch (VMEM)
    """One grid step per block of TM bags: gather+segment-sum tokens, then one matmul."""
    tm = acc_ref.shape[0]
    bag0 = pl.program_id(0) * tm

    # Token range covered by this bag block (offsets_ext is non-decreasing,
    # padded bags have start == end == T, so they contribute nothing).
    tok_start = offext_ref[bag0]
    tok_end = offext_ref[bag0 + tm]

    acc_ref[...] = jnp.zeros_like(acc_ref)

    def _accumulate(t, carry):
        tok = text_ref[t]                      # token id          (SMEM scalar)
        r = bag_ref[t] - bag0                  # local bag row     (SMEM scalar)
        row = emb_ref[pl.ds(tok, 1), :].astype(jnp.float32)        # (1, D) VMEM gather
        acc_ref[pl.ds(r, 1), :] += row
        return carry

    lax.fori_loop(tok_start, tok_end, _accumulate, 0)

    # Mean over each bag (inv count is 0 for empty/padded bags -> mean = 0,
    # logits = bias, matching nn.EmbeddingBag(mode='mean') for empty bags).
    mean_emb = acc_ref[...] * inv_cnt_ref[...]                     # (TM, D)
    logits = jnp.dot(mean_emb, wt_ref[...],
                     preferred_element_type=jnp.float32)           # (TM, Cp) on MXU
    out_ref[...] = (logits + bias_ref[...]).astype(out_ref.dtype)


def text_classification_forward(text, offsets, emb_weight, lin_weight, lin_bias,
                                *, block_bags=128):
    """Equivalent of TorchTextClassificationModel.forward(text, offsets).

    offsets are assumed sorted, starting at 0, with each bag's tokens
    contiguous in `text` (PyTorch EmbeddingBag convention).
    """
    V, D = emb_weight.shape
    C = lin_weight.shape[0]
    B = offsets.shape[0]
    T = text.shape[0]

    TM = max(8, (block_bags // 8) * 8)                      # sublane-aligned bag tile
    Bp = max(1, -(-B // TM)) * TM                           # bags padded to a multiple of TM
    Cp = -(-C // _LANES) * _LANES                           # lane-dense class dim

    text = text.astype(jnp.int32)
    offsets = offsets.astype(jnp.int32)

    # ---- O(T + B) index glue (no one-hots, no dense matrices) --------------
    if T > 0:
        positions = jnp.arange(T, dtype=jnp.int32)
        bag_ids = (jnp.searchsorted(offsets, positions, side="right") - 1).astype(jnp.int32)
        text_p = text
    else:
        # Keep scalar-prefetch arrays non-empty; the token loop never runs.
        bag_ids = jnp.zeros((1,), jnp.int32)
        text_p = jnp.zeros((1,), jnp.int32)

    # Extended offsets: real offsets, then T for padded bags and the sentinel.
    offsets_ext = jnp.concatenate(
        [offsets, jnp.full((Bp + 1 - B,), T, dtype=jnp.int32)])            # (Bp + 1,)
    counts = offsets_ext[1:] - offsets_ext[:-1]                            # (Bp,)
    inv_counts = jnp.where(counts > 0,
                           1.0 / jnp.maximum(counts, 1).astype(jnp.float32),
                           0.0).reshape(Bp, 1)                             # (Bp, 1)

    # Lane-dense linear params (class dim padded to a multiple of 128).
    wt_p = jnp.zeros((D, Cp), jnp.float32).at[:, :C].set(lin_weight.T.astype(jnp.float32))
    bias_p = jnp.zeros((1, Cp), jnp.float32).at[:, :C].set(lin_bias.astype(jnp.float32))

    emb_tab = emb_weight.astype(jnp.float32)                               # (V, D) resident

    cost = pl.CostEstimate(
        flops=2 * max(T, 1) * D + 2 * Bp * D * Cp,
        transcendentals=0,
        bytes_accessed=(V * D + D * Cp + Cp + Bp + Bp * Cp) * 4 + (2 * max(T, 1) + Bp + 1) * 4,
    )

    out = pl.pallas_call(
        _embbag_linear_kernel,
        out_shape=jax.ShapeDtypeStruct((Bp, Cp), jnp.float32),
        grid_spec=pltpu.PrefetchScalarGridSpec(
            num_scalar_prefetch=3,                       # text, bag_ids, offsets_ext -> SMEM
            grid=(Bp // TM,),
            in_specs=[
                # Per-bag inverse counts for this block.
                pl.BlockSpec((TM, 1), lambda i, txt, bag, off: (i, 0)),
                # Linear weight / bias stay resident (constant block index).
                pl.BlockSpec((D, Cp), lambda i, txt, bag, off: (0, 0)),
                pl.BlockSpec((1, Cp), lambda i, txt, bag, off: (0, 0)),
                # Embedding table resident in VMEM; rows gathered in-kernel.
                pl.BlockSpec((V, D), lambda i, txt, bag, off: (0, 0)),
            ],
            out_specs=pl.BlockSpec((TM, Cp), lambda i, txt, bag, off: (i, 0)),
            scratch_shapes=[pltpu.VMEM((TM, D), jnp.float32)],
        ),
        compiler_params=pltpu.CompilerParams(
            dimension_semantics=("parallel",)),
        cost_estimate=cost,
    )(text_p, bag_ids, offsets_ext, inv_counts, wt_p, bias_p, emb_tab)

    return out[:B, :C]


def _reference_forward(text, offsets, emb_weight, lin_weight, lin_bias):
    """Pure-JAX reference mirroring nn.EmbeddingBag(mode='mean') + nn.Linear."""
    B = offsets.shape[0]
    T = text.shape[0]
    gathered = emb_weight[text]                                   # (T, D)
    positions = jnp.arange(T, dtype=jnp.int32)
    bag_ids = jnp.searchsorted(offsets.astype(jnp.int32), positions, side="right") - 1
    seg_sum = jax.ops.segment_sum(gathered, bag_ids, num_segments=B)
    seg_cnt = jax.ops.segment_sum(jnp.ones((T,), jnp.float32), bag_ids, num_segments=B)
    mean_emb = seg_sum / jnp.maximum(seg_cnt, 1.0)[:, None]
    return jnp.dot(mean_emb, lin_weight.T,
                   precision=jax.lax.Precision.HIGHEST) + lin_bias


if __name__ == "__main__":
    key = jax.random.PRNGKey(0)
    k_emb, k_lin, k_text = jax.random.split(key, 3)

    vocab_size = 128
    embed_dim = 32
    num_class = 4

    # Ragged bags, including a leading empty bag and another empty bag (index 4)
    # to exercise duplicate-offset handling and the bias-only path.
    lengths = [0, 3, 5, 1, 0, 7, 2, 5]
    batch = len(lengths)
    total_tokens = int(sum(lengths))

    lengths_arr = jnp.array(lengths, dtype=jnp.int32)
    offsets = jnp.concatenate(
        [jnp.zeros((1,), jnp.int32), jnp.cumsum(lengths_arr)[:-1].astype(jnp.int32)])

    # Deterministic parameter init mirroring init_weights(): U(-0.5, 0.5), bias = 0.
    emb_weight = jax.random.uniform(k_emb, (vocab_size, embed_dim),
                                    minval=-0.5, maxval=0.5, dtype=jnp.float32)
    lin_weight = jax.random.uniform(k_lin, (num_class, embed_dim),
                                    minval=-0.5, maxval=0.5, dtype=jnp.float32)
    lin_bias = jnp.zeros((num_class,), dtype=jnp.float32)

    text = jax.random.randint(k_text, (total_tokens,), 0, vocab_size, dtype=jnp.int32)

    fwd = functools.partial(text_classification_forward, block_bags=128)
    logits = fwd(text, offsets, emb_weight, lin_weight, lin_bias)
    logits = jax.block_until_ready(logits)

    ref = _reference_forward(text, offsets, emb_weight, lin_weight, lin_bias)
    assert logits.shape == (batch, num_class)
    assert jnp.allclose(logits, ref, atol=1e-4, rtol=1e-4), "mismatch vs reference"

    print("KERNEL_OK")
</pallas_src>

<mosaic_0001>
module attributes {stable_mosaic.version = 11 : i64} {
  func.func @_embbag_linear_kernel(%arg0: i32, %arg1: memref<23xi32, #tpu.memory_space<smem>>, %arg2: memref<23xi32, #tpu.memory_space<smem>>, %arg3: memref<129xi32, #tpu.memory_space<smem>>, %arg4: memref<128x1xf32, #tpu.memory_space<vmem>>, %arg5: memref<32x128xf32, #tpu.memory_space<vmem>>, %arg6: memref<1x128xf32, #tpu.memory_space<vmem>>, %arg7: memref<128x32xf32, #tpu.memory_space<vmem>>, %arg8: memref<128x128xf32, #tpu.memory_space<vmem>>, %arg9: memref<128x32xf32, #tpu.memory_space<vmem>>) attributes {dimension_semantics = [#tpu.dimension_semantics<parallel>], iteration_bounds = array<i64: 1>, scalar_prefetch = 3 : i64, scratch_operands = 1 : i64, tpu.core_type = #tpu.core_type<tc>, window_params = [{transform_indices = @transform_0, window_bounds = array<i64: 128, 1>}, {pipeline_mode = #tpu.pipeline_mode<synchronous>, transform_indices = @transform_1, window_bounds = array<i64: 32, 128>}, {pipeline_mode = #tpu.pipeline_mode<synchronous>, transform_indices = @transform_2, window_bounds = array<i64: 1, 128>}, {pipeline_mode = #tpu.pipeline_mode<synchronous>, transform_indices = @transform_3, window_bounds = array<i64: 128, 32>}, {transform_indices = @transform_4, window_bounds = array<i64: 128, 128>}]} {
    %c128_i32 = arith.constant 128 : i32
    %0 = arith.muli %arg0, %c128_i32 : i32
    %1 = arith.index_cast %0 : i32 to index
    %2 = memref.load %arg3[%1] : memref<129xi32, #tpu.memory_space<smem>>
    %c128_i32_0 = arith.constant 128 : i32
    %3 = arith.addi %0, %c128_i32_0 : i32
    %4 = arith.index_cast %3 : i32 to index
    %5 = memref.load %arg3[%4] : memref<129xi32, #tpu.memory_space<smem>>
    %cst = arith.constant 0.000000e+00 : f32
    %6 = vector.broadcast %cst : f32 to vector<128x32xf32>
    %c0 = arith.constant 0 : index
    %c0_1 = arith.constant 0 : index
    %7 = vector.load %arg9[%c0, %c0_1] : memref<128x32xf32, #tpu.memory_space<vmem>>, vector<128x32xf32>
    tpu.vector_store %arg9[%c0, %c0_1], %6 {strides = array<i32>} : memref<128x32xf32, #tpu.memory_space<vmem>>, vector<128x32xf32>,
    %c0_i32 = arith.constant 0 : i32
    %8 = arith.subi %5, %2 : i32
    %9 = arith.addi %2, %8 : i32
    %c1_i32 = arith.constant 1 : i32
    scf.for %arg10 = %2 to %9 step %c1_i32  : i32 {
      %20 = arith.index_cast %arg10 : i32 to index
      %21 = memref.load %arg1[%20] : memref<23xi32, #tpu.memory_space<smem>>
      %22 = arith.index_cast %arg10 : i32 to index
      %23 = memref.load %arg2[%22] : memref<23xi32, #tpu.memory_space<smem>>
      %24 = arith.subi %23, %0 : i32
      %25 = arith.index_cast %21 : i32 to index
      %c0_13 = arith.constant 0 : index
      %26 = vector.load %arg7[%25, %c0_13] : memref<128x32xf32, #tpu.memory_space<vmem>>, vector<1x32xf32>
      %27 = arith.index_cast %24 : i32 to index
      %c0_14 = arith.constant 0 : index
      %28 = vector.load %arg9[%27, %c0_14] : memref<128x32xf32, #tpu.memory_space<vmem>>, vector<1x32xf32>
      %29 = arith.addf %28, %26 : vector<1x32xf32>
      %30 = arith.index_cast %24 : i32 to index
      %c0_15 = arith.constant 0 : index
      %31 = vector.load %arg9[%30, %c0_15] : memref<128x32xf32, #tpu.memory_space<vmem>>, vector<1x32xf32>
      tpu.vector_store %arg9[%30, %c0_15], %29 {strides = array<i32>} : memref<128x32xf32, #tpu.memory_space<vmem>>, vector<1x32xf32>,
    }
    %c0_2 = arith.constant 0 : index
    %c0_3 = arith.constant 0 : index
    %10 = vector.load %arg9[%c0_2, %c0_3] : memref<128x32xf32, #tpu.memory_space<vmem>>, vector<128x32xf32>
    %c0_4 = arith.constant 0 : index
    %c0_5 = arith.constant 0 : index
    %11 = vector.load %arg4[%c0_4, %c0_5] : memref<128x1xf32, #tpu.memory_space<vmem>>, vector<128x1xf32>
    %12 = vector.broadcast %11 : vector<128x1xf32> to vector<128x32xf32>
    %13 = arith.mulf %10, %12 : vector<128x32xf32>
    %c0_6 = arith.constant 0 : index
    %c0_7 = arith.constant 0 : index
    %14 = vector.load %arg5[%c0_6, %c0_7] : memref<32x128xf32, #tpu.memory_space<vmem>>, vector<32x128xf32>
    %cst_8 = arith.constant dense<0.000000e+00> : vector<128x128xf32>
    %15 = tpu.matmul %13, %14, %cst_8 {dimension_numbers = #tpu.dot_dimension_numbers<[1], [0], [0], [1], [0, 0, 1, 1], [], []>} : vector<128x32xf32>, vector<32x128xf32>, vector<128x128xf32> -> vector<128x128xf32>
    %c0_9 = arith.constant 0 : index
    %c0_10 = arith.constant 0 : index
    %16 = vector.load %arg6[%c0_9, %c0_10] : memref<1x128xf32, #tpu.memory_space<vmem>>, vector<1x128xf32>
    %17 = vector.broadcast %16 : vector<1x128xf32> to vector<128x128xf32>
    %18 = arith.addf %15, %17 : vector<128x128xf32>
    %c0_11 = arith.constant 0 : index
    %c0_12 = arith.constant 0 : index
    %19 = vector.load %arg8[%c0_11, %c0_12] : memref<128x128xf32, #tpu.memory_space<vmem>>, vector<128x128xf32>
    tpu.vector_store %arg8[%c0_11, %c0_12], %18 {strides = array<i32>} : memref<128x128xf32, #tpu.memory_space<vmem>>, vector<128x128xf32>,
    return
  }
  func.func @transform_0(%arg0: i32, %arg1: memref<23xi32, #tpu.memory_space<smem>>, %arg2: memref<23xi32, #tpu.memory_space<smem>>, %arg3: memref<129xi32, #tpu.memory_space<smem>>) -> (i32, i32) {
    %c0_i32 = arith.constant 0 : i32
    %c0_i32_0 = arith.constant 0 : i32
    return %arg0, %c0_i32 : i32, i32
  }
  func.func @transform_1(%arg0: i32, %arg1: memref<23xi32, #tpu.memory_space<smem>>, %arg2: memref<23xi32, #tpu.memory_space<smem>>, %arg3: memref<129xi32, #tpu.memory_space<smem>>) -> (i32, i32) {
    %c0_i32 = arith.constant 0 : i32
    %c0_i32_0 = arith.constant 0 : i32
    %c0_i32_1 = arith.constant 0 : i32
    return %c0_i32, %c0_i32_0 : i32, i32
  }
  func.func @transform_2(%arg0: i32, %arg1: memref<23xi32, #tpu.memory_space<smem>>, %arg2: memref<23xi32, #tpu.memory_space<smem>>, %arg3: memref<129xi32, #tpu.memory_space<smem>>) -> (i32, i32) {
    %c0_i32 = arith.constant 0 : i32
    %c0_i32_0 = arith.constant 0 : i32
    %c0_i32_1 = arith.constant 0 : i32
    return %c0_i32, %c0_i32_0 : i32, i32
  }
  func.func @transform_3(%arg0: i32, %arg1: memref<23xi32, #tpu.memory_space<smem>>, %arg2: memref<23xi32, #tpu.memory_space<smem>>, %arg3: memref<129xi32, #tpu.memory_space<smem>>) -> (i32, i32) {
    %c0_i32 = arith.constant 0 : i32
    %c0_i32_0 = arith.constant 0 : i32
    %c0_i32_1 = arith.constant 0 : i32
    return %c0_i32, %c0_i32_0 : i32, i32
  }
  func.func @transform_4(%arg0: i32, %arg1: memref<23xi32, #tpu.memory_space<smem>>, %arg2: memref<23xi32, #tpu.memory_space<smem>>, %arg3: memref<129xi32, #tpu.memory_space<smem>>) -> (i32, i32) {
    %c0_i32 = arith.constant 0 : i32
    %c0_i32_0 = arith.constant 0 : i32
    return %arg0, %c0_i32 : i32, i32
  }
}

</mosaic_0001>

<llo_original>
// kernel: tpu_custom_call.1
$region0: #{tpu_custom_call.1}
  #allocation0 [shape = 'u32[]', space=smem, size = 0x4, offset = 0x4, fixed_abs, tag = 'smem constant byte address 0x4 - core index']
  #allocation1 [shape = 'u32[72,128]{1,0:T(1,128)}', space=vmem, size = 0x9000, scoped, tag = 'internal scratch']
  #allocation2 [shape = 'f32[128,32]{1,0:T(8,128)}', space=vmem, size = 0x10000, scoped, tag = 'scratch operand']
  #allocation3 [shape = 's32[1]{0}', space=sflag, size = 0x4, scoped, tag = 'scoped memory for tpu_custom_call.1']
  #allocation4 [shape = 'u8[512]{0}', space=smem, size = 0x200, scoped, tag = 'prefetched SMEM operand 0']
  #allocation5 [shape = 'u8[512]{0}', space=smem, size = 0x200, scoped, tag = 'prefetched SMEM operand 1']
  #allocation6 [shape = 'u8[1024]{0}', space=smem, size = 0x400, scoped, tag = 'prefetched SMEM operand 2']
  %s0 = inlined_call_operand.vmem [shape: s32[23], index: 0, kind: input, shape index: {}]
  %s1 = inlined_call_operand.vmem [shape: s32[23], index: 1, kind: input, shape index: {}]
  %s2 = inlined_call_operand.vmem [shape: s32[129], index: 2, kind: input, shape index: {}]
  %s3 = inlined_call_operand.vmem [shape: f32[128,1], index: 3, kind: input, shape index: {}]
  %s4 = inlined_call_operand.vmem [shape: f32[32,128], index: 4, kind: input, shape index: {}]
  %s5 = inlined_call_operand.vmem [shape: f32[1,128], index: 5, kind: input, shape index: {}]
  %s6 = inlined_call_operand.vmem [shape: f32[128,32], index: 6, kind: input, shape index: {}]
  %s7 = inlined_call_operand.hbm [shape: f32[128,128], index: 7, kind: output, shape index: {}]
  %s8 = sld [smem:[#allocation0]]
  $region33: #{tpu_custom_call.1} parent=0
    _
  %s10 = ssub.s32 1, %s8
  %s11 = scalar_select 0, %s10, %s8
  %s13 = sshll.u32 %s0, 4
  %s14 = int_to_ptr.vmem [resolvable:$true] %s13
  %16 = dma.vmem_to_smem %s14, 16, [#allocation4], [#allocation3]
  %s18 = sshll.u32 %s1, 4
  %s19 = int_to_ptr.vmem [resolvable:$true] %s18
  %21 = dma.vmem_to_smem %s19, 16, [#allocation5], [#allocation3]
  %s23 = sshll.u32 %s2, 4
  %s24 = int_to_ptr.vmem [resolvable:$true] %s23
  %26 = dma.vmem_to_smem %s24, 32, [#allocation6], [#allocation3]
  %28 = dma.done [#allocation3], 64
  %29 = sfence
  $region1: #{tpu_custom_call.1} parent=0
    #allocation7 [shape = 'u8[65536]{0}', space=vmem, size = 0x10000, scoped, tag = 'output window, operand 0, single buffered']
    #allocation8 [shape = 's32[1]{0}', space=sflag, size = 0x4, scoped, tag = 'scoped memory for tpu_custom_call.1']
    %30 = vsyncpa [#allocation8], 0
    // Predicated region
    $region2: #{tpu_custom_call.1} parent=1 // pred_check
      _
    $region3: #{tpu_custom_call.1} parent=1 // pred_check_branch
      %32 = sbr.rel (0) target = $region5
    $region4: #{tpu_custom_call.1} parent=1 // pred_region
      _
    $region5: #{tpu_custom_call.1} parent=1 // pred_fallthru
      _
    // Predicated region
    $region6: #{tpu_custom_call.1} parent=1 // pred_check
      _
    $region7: #{tpu_custom_call.1} parent=1 // pred_check_branch
      %34 = sbr.rel (0) target = $region9
    $region8: #{tpu_custom_call.1} parent=1 // pred_region
      _
    $region9: #{tpu_custom_call.1} parent=1 // pred_fallthru
      _
    // Predicated region
    $region10: #{tpu_custom_call.1} parent=1 // pred_check
      _
    $region11: #{tpu_custom_call.1} parent=1 // pred_check_branch
      %36 = sbr.rel (0) target = $region13
    $region12: #{tpu_custom_call.1} parent=1 // pred_region
      _
    $region13: #{tpu_custom_call.1} parent=1 // pred_fallthru
      _
    // Predicated region
    $region14: #{tpu_custom_call.1} parent=1 // pred_check
      _
    $region15: #{tpu_custom_call.1} parent=1 // pred_check_branch
      %38 = sbr.rel (0) target = $region17
    $region16: #{tpu_custom_call.1} parent=1 // pred_region
      _
    $region17: #{tpu_custom_call.1} parent=1 // pred_fallthru
      _
    %s39 = smul.u32 0, 128
    %s40 = sld [smem:[#allocation6 + %s39]]
    %s41 = sadd.s32 %s39, 128
    %s42 = sld [smem:[#allocation6 + %s41]]
    %vm43 = vcmask 261120
    %44 = vst.msk [vmem:[#allocation2] sm:$0xff] %vm43, 0.0
    %45 = vst.msk [vmem:[#allocation2 + $0x8] sm:$0xff] %vm43, 0.0
    %46 = vst.msk [vmem:[#allocation2 + $0x10] sm:$0xff] %vm43, 0.0
    %47 = vst.msk [vmem:[#allocation2 + $0x18] sm:$0xff] %vm43, 0.0
    %48 = vst.msk [vmem:[#allocation2 + $0x20] sm:$0xff] %vm43, 0.0
    %49 = vst.msk [vmem:[#allocation2 + $0x28] sm:$0xff] %vm43, 0.0
    %50 = vst.msk [vmem:[#allocation2 + $0x30] sm:$0xff] %vm43, 0.0
    %51 = vst.msk [vmem:[#allocation2 + $0x38] sm:$0xff] %vm43, 0.0
    %52 = vst.msk [vmem:[#allocation2 + $0x40] sm:$0xff] %vm43, 0.0
    %53 = vst.msk [vmem:[#allocation2 + $0x48] sm:$0xff] %vm43, 0.0
    %54 = vst.msk [vmem:[#allocation2 + $0x50] sm:$0xff] %vm43, 0.0
    %55 = vst.msk [vmem:[#allocation2 + $0x58] sm:$0xff] %vm43, 0.0
    %56 = vst.msk [vmem:[#allocation2 + $0x60] sm:$0xff] %vm43, 0.0
    %57 = vst.msk [vmem:[#allocation2 + $0x68] sm:$0xff] %vm43, 0.0
    %58 = vst.msk [vmem:[#allocation2 + $0x70] sm:$0xff] %vm43, 0.0
    %59 = vst.msk [vmem:[#allocation2 + $0x78] sm:$0xff] %vm43, 0.0
    // While loop
    $region18: #{tpu_custom_call.1} parent=1 // loop_pre_header
      _
    $region19: #{tpu_custom_call.1} parent=1 // loop_header
      %s61 = sphi %s40, %s63
      %p62 = scmp.ge.s32.totalorder %s61, %s42
    $region20: #{tpu_custom_call.1} parent=1 // loop_header_branch
      %65 = sbr.rel (%p62) target = $region24
    $region21: #{tpu_custom_call.1} parent=1 // loop_body
      %s66 = sld [smem:[#allocation4 + %s61]]
      %s67 = sld [smem:[#allocation5 + %s61]]
      %s68 = ssub.s32 %s67, %s39
      %s69 = scalar_lea.vmem %s6, %s66
      %v70 = vld [vmem:[%s69] sm:$0x1]
      %s71 = scalar_lea.vmem [#allocation2], %s68
      %v72 = vld [vmem:[%s71] sm:$0x1]
      %v73 = vadd.f32 %v72, %v70
      %vm74 = vcmask 253952
      %75 = vst.msk [vmem:[%s71] sm:$0x1] %vm74, %v73
    $region22: #{tpu_custom_call.1} parent=1 // loop_footer
      %s63 = sadd.s32 %s61, 1
    $region23: #{tpu_custom_call.1} parent=1 // loop_footer_branch
      %60 = sbr.rel target = $region19
    $region24: #{tpu_custom_call.1} parent=1 // loop_exit
      _
    %v76 = vld [vmem:[#allocation2] sm:$0xff]
    %v77 = vld [vmem:[#allocation2 + $0x8] sm:$0xff]
    %v78 = vld [vmem:[#allocation2 + $0x10] sm:$0xff]
    %v79 = vld [vmem:[#allocation2 + $0x18] sm:$0xff]
    %v80 = vld [vmem:[#allocation2 + $0x20] sm:$0xff]
    %v81 = vld [vmem:[#allocation2 + $0x28] sm:$0xff]
    %v82 = vld [vmem:[#allocation2 + $0x30] sm:$0xff]
    %v83 = vld [vmem:[#allocation2 + $0x38] sm:$0xff]
    %v84 = vld [vmem:[#allocation2 + $0x40] sm:$0xff]
    %v85 = vld [vmem:[#allocation2 + $0x48] sm:$0xff]
    %v86 = vld [vmem:[#allocation2 + $0x50] sm:$0xff]
    %v87 = vld [vmem:[#allocation2 + $0x58] sm:$0xff]
    %v88 = vld [vmem:[#allocation2 + $0x60] sm:$0xff]
    %v89 = vld [vmem:[#allocation2 + $0x68] sm:$0xff]
    %v90 = vld [vmem:[#allocation2 + $0x70] sm:$0xff]
    %v91 = vld [vmem:[#allocation2 + $0x78] sm:$0xff]
    %v92 = vld [vmem:[%s3] sm:$0xff]
    %v93 = vld [vmem:[%s3 + $0x8] sm:$0xff]
    %v94 = vld [vmem:[%s3 + $0x10] sm:$0xff]
    %v95 = vld [vmem:[%s3 + $0x18] sm:$0xff]
    %v96 = vld [vmem:[%s3 + $0x20] sm:$0xff]
    %v97 = vld [vmem:[%s3 + $0x28] sm:$0xff]
    %v98 = vld [vmem:[%s3 + $0x30] sm:$0xff]
    %v99 = vld [vmem:[%s3 + $0x38] sm:$0xff]
    %v100 = vld [vmem:[%s3 + $0x40] sm:$0xff]
    %v101 = vld [vmem:[%s3 + $0x48] sm:$0xff]
    %v102 = vld [vmem:[%s3 + $0x50] sm:$0xff]
    %v103 = vld [vmem:[%s3 + $0x58] sm:$0xff]
    %v104 = vld [vmem:[%s3 + $0x60] sm:$0xff]
    %v105 = vld [vmem:[%s3 + $0x68] sm:$0xff]
    %v106 = vld [vmem:[%s3 + $0x70] sm:$0xff]
    %v107 = vld [vmem:[%s3 + $0x78] sm:$0xff]
    %109 = vset.pattern.permute.xlu0 0
    %110 = vperm.xlu0 %109, %v92
    %v111 = vpop.permute.xlu0 %110
    %114 = vset.pattern.permute.xlu0 0
    %115 = vperm.xlu0 %114, %v93
    %v116 = vpop.permute.xlu0 %115
    %119 = vset.pattern.permute.xlu0 0
    %120 = vperm.xlu0 %119, %v94
    %v121 = vpop.permute.xlu0 %120
    %124 = vset.pattern.permute.xlu0 0
    %125 = vperm.xlu0 %124, %v95
    %v126 = vpop.permute.xlu0 %125
    %129 = vset.pattern.permute.xlu0 0
    %130 = vperm.xlu0 %129, %v96
    %v131 = vpop.permute.xlu0 %130
    %134 = vset.pattern.permute.xlu0 0
    %135 = vperm.xlu0 %134, %v97
    %v136 = vpop.permute.xlu0 %135
    %139 = vset.pattern.permute.xlu0 0
    %140 = vperm.xlu0 %139, %v98
    %v141 = vpop.permute.xlu0 %140
    %144 = vset.pattern.permute.xlu0 0
    %145 = vperm.xlu0 %144, %v99
    %v146 = vpop.permute.xlu0 %145
    %149 = vset.pattern.permute.xlu0 0
    %150 = vperm.xlu0 %149, %v100
    %v151 = vpop.permute.xlu0 %150
    %154 = vset.pattern.permute.xlu0 0
    %155 = vperm.xlu0 %154, %v101
    %v156 = vpop.permute.xlu0 %155
    %159 = vset.pattern.permute.xlu0 0
    %160 = vperm.xlu0 %159, %v102
    %v161 = vpop.permute.xlu0 %160
    %164 = vset.pattern.permute.xlu0 0
    %165 = vperm.xlu0 %164, %v103
    %v166 = vpop.permute.xlu0 %165
    %169 = vset.pattern.permute.xlu0 0
    %170 = vperm.xlu0 %169, %v104
    %v171 = vpop.permute.xlu0 %170
    %174 = vset.pattern.permute.xlu0 0
    %175 = vperm.xlu0 %174, %v105
    %v176 = vpop.permute.xlu0 %175
    %179 = vset.pattern.permute.xlu0 0
    %180 = vperm.xlu0 %179, %v106
    %v181 = vpop.permute.xlu0 %180
    %184 = vset.pattern.permute.xlu0 0
    %185 = vperm.xlu0 %184, %v107
    %v186 = vpop.permute.xlu0 %185
    %v188 = vmul.f32 %v76, %v111
    %v189 = vmul.f32 %v77, %v116
    %v190 = vmul.f32 %v78, %v121
    %v191 = vmul.f32 %v79, %v126
    %v192 = vmul.f32 %v80, %v131
    %v193 = vmul.f32 %v81, %v136
    %v194 = vmul.f32 %v82, %v141
    %v195 = vmul.f32 %v83, %v146
    %v196 = vmul.f32 %v84, %v151
    %v197 = vmul.f32 %v85, %v156
    %v198 = vmul.f32 %v86, %v161
    %v199 = vmul.f32 %v87, %v166
    %v200 = vmul.f32 %v88, %v171
    %v201 = vmul.f32 %v89, %v176
    %v202 = vmul.f32 %v90, %v181
    %v203 = vmul.f32 %v91, %v186
    %v204 = vld [vmem:[%s4] sm:$0xff]
    %v205 = vld [vmem:[%s4 + $0x8] sm:$0xff]
    %v206 = vld [vmem:[%s4 + $0x10] sm:$0xff]
    %v207 = vld [vmem:[%s4 + $0x18] sm:$0xff]
    %v208 = vld [vmem:[%s5] sm:$0x1]
    %v210 = vperm.slane %v208, 0
    %v213 = vsel %vm43, %v188, 0
    %v216 = vsel %vm43, %v189, 0
    %v219 = vsel %vm43, %v190, 0
    %v222 = vsel %vm43, %v191, 0
    %v225 = vsel %vm43, %v192, 0
    %v228 = vsel %vm43, %v193, 0
    %v231 = vsel %vm43, %v194, 0
    %v234 = vsel %vm43, %v195, 0
    %v237 = vsel %vm43, %v196, 0
    %v240 = vsel %vm43, %v197, 0
    %v243 = vsel %vm43, %v198, 0
    %v246 = vsel %vm43, %v199, 0
    %v249 = vsel %vm43, %v200, 0
    %v252 = vsel %vm43, %v201, 0
    %v255 = vsel %vm43, %v202, 0
    %v258 = vsel %vm43, %v203, 0
    %260 = vmatpush.msra.mxu0 0.0
    %261 = vmatpush.msra.mxu0 0.0
    %262 = vmatpush.msra.mxu0 0.0
    %263 = vmatpush.msra.mxu0 0.0
    %264 = vmatpush.msra.mxu0 0.0
    %265 = vmatpush.msra.mxu0 0.0
    %266 = vmatpush.msra.mxu0 0.0
    %267 = vmatpush.msra.mxu0 0.0
    %268 = vmatpush.msra.mxu0 0.0
    %269 = vmatpush.msra.mxu0 0.0
    %270 = vmatpush.msra.mxu0 0.0
    %271 = vmatpush.msra.mxu0 0.0
    %272 = vmatpush.msra.mxu0 %v207
    %273 = vmatpush.msra.mxu0 %v206
    %274 = vmatpush.msra.mxu0 %v205
    %275 = vmatpush.msra.mxu0 %v204
    %276 = vmatmul.f32.gmra.mxu0 %v213
    %v277 = vpop.f32.mrf.mxu0
    %v278 = vadd.f32 %v210, %v277
    %279 = vmatmul.f32.gmra.mxu0 %v216
    %v280 = vpop.f32.mrf.mxu0
    %v281 = vadd.f32 %v210, %v280
    %282 = vmatmul.f32.gmra.mxu0 %v219
    %v283 = vpop.f32.mrf.mxu0
    %v284 = vadd.f32 %v210, %v283
    %285 = vmatmul.f32.gmra.mxu0 %v222
    %v286 = vpop.f32.mrf.mxu0
    %v287 = vadd.f32 %v210, %v286
    %288 = vmatmul.f32.gmra.mxu0 %v225
    %v289 = vpop.f32.mrf.mxu0
    %v290 = vadd.f32 %v210, %v289
    %291 = vmatmul.f32.gmra.mxu0 %v228
    %v292 = vpop.f32.mrf.mxu0
    %v293 = vadd.f32 %v210, %v292
    %294 = vmatmul.f32.gmra.mxu0 %v231
    %v295 = vpop.f32.mrf.mxu0
    %v296 = vadd.f32 %v210, %v295
    %297 = vmatmul.f32.gmra.mxu0 %v234
    %v298 = vpop.f32.mrf.mxu0
    %v299 = vadd.f32 %v210, %v298
    %300 = vmatmul.f32.gmra.mxu0 %v237
    %v301 = vpop.f32.mrf.mxu0
    %v302 = vadd.f32 %v210, %v301
    %303 = vmatmul.f32.gmra.mxu0 %v240
    %v304 = vpop.f32.mrf.mxu0
    %v305 = vadd.f32 %v210, %v304
    %306 = vmatmul.f32.gmra.mxu0 %v243
    %v307 = vpop.f32.mrf.mxu0
    %v308 = vadd.f32 %v210, %v307
    %309 = vmatmul.f32.gmra.mxu0 %v246
    %v310 = vpop.f32.mrf.mxu0
    %v311 = vadd.f32 %v210, %v310
    %312 = vmatmul.f32.gmra.mxu0 %v249
    %v313 = vpop.f32.mrf.mxu0
    %v314 = vadd.f32 %v210, %v313
    %315 = vmatmul.f32.gmra.mxu0 %v252
    %v316 = vpop.f32.mrf.mxu0
    %v317 = vadd.f32 %v210, %v316
    %318 = vmatmul.f32.gmra.mxu0 %v255
    %v319 = vpop.f32.mrf.mxu0
    %v320 = vadd.f32 %v210, %v319
    %321 = vmatmul.f32.gmra.mxu0 %v258
    %v322 = vpop.f32.mrf.mxu0
    %v323 = vadd.f32 %v210, %v322
    %324 = vdwg.mxu0
    %325 = vst [vmem:[#allocation7] sm:$0xff] %v278
    %326 = vst [vmem:[#allocation7 + $0x8] sm:$0xff] %v281
    %327 = vst [vmem:[#allocation7 + $0x10] sm:$0xff] %v284
    %328 = vst [vmem:[#allocation7 + $0x18] sm:$0xff] %v287
    %329 = vst [vmem:[#allocation7 + $0x20] sm:$0xff] %v290
    %330 = vst [vmem:[#allocation7 + $0x28] sm:$0xff] %v293
    %331 = vst [vmem:[#allocation7 + $0x30] sm:$0xff] %v296
    %332 = vst [vmem:[#allocation7 + $0x38] sm:$0xff] %v299
    %333 = vst [vmem:[#allocation7 + $0x40] sm:$0xff] %v302
    %334 = vst [vmem:[#allocation7 + $0x48] sm:$0xff] %v305
    %335 = vst [vmem:[#allocation7 + $0x50] sm:$0xff] %v308
    %336 = vst [vmem:[#allocation7 + $0x58] sm:$0xff] %v311
    %337 = vst [vmem:[#allocation7 + $0x60] sm:$0xff] %v314
    %338 = vst [vmem:[#allocation7 + $0x68] sm:$0xff] %v317
    %339 = vst [vmem:[#allocation7 + $0x70] sm:$0xff] %v320
    %340 = vst [vmem:[#allocation7 + $0x78] sm:$0xff] %v323
    // Predicated region
    $region25: #{tpu_custom_call.1} parent=1 // pred_check
      _
    $region26: #{tpu_custom_call.1} parent=1 // pred_check_branch
      %342 = sbr.rel (0) target = $region28
    $region27: #{tpu_custom_call.1} parent=1 // pred_region
      %344 = vsyncadd [#allocation8], 0
      %s345 = sshll.u32 [#allocation7], 4
      %s346 = int_to_ptr.vmem [resolvable:$true] %s345
      %s347 = sshll.u32 %s7, 4
      %s348 = int_to_ptr.hbm [resolvable:$true] %s347
      %353 = dma.vmem_to_hbm [thread:$0]  %s346, 2048, %s348, [#allocation8], 128, 128, 8
    $region28: #{tpu_custom_call.1} parent=1 // pred_fallthru
      _
    // Predicated region
    $region29: #{tpu_custom_call.1} parent=1 // pred_check
      _
    $region30: #{tpu_custom_call.1} parent=1 // pred_check_branch
      %355 = sbr.rel (0) target = $region32
    $region31: #{tpu_custom_call.1} parent=1 // pred_region
      %357 = dma.done [#allocation8], 2048
    $region32: #{tpu_custom_call.1} parent=1 // pred_fallthru
      _
    %358 = vsyncpa [#allocation8], 1

</llo_original>
